<compile_context>
chip_gen: v7x
topology: tpu7x:2x2x1
jax: 0.10.0
libtpu: 0.0.40
codegen_flags: <defaults>
</compile_context>

<pallas_src>
import functools

import jax
import jax.numpy as jnp
from jax.experimental import pallas as pl
from jax.experimental.pallas import tpu as pltpu


# ---------------------------------------------------------------------------
# Fused Pallas kernel: actor + critic forward in one matmul chain
# ---------------------------------------------------------------------------
def _fused_kernel(bert_ref, grid_ref, w1_ref, w2_ref, w3g_ref, wrest_ref,
                  bias_ref, out_ref):
    x = bert_ref[...]      # (TB, E)
    g = grid_ref[...]      # (TB, G)

    # Static, 128-aligned slices of the packed bias row (1, 1024).
    b1 = bias_ref[:, 0:512]
    b2 = bias_ref[:, 512:640]
    b3 = bias_ref[:, 640:768]
    b4 = bias_ref[:, 768:896]
    b5 = bias_ref[:, 896:1024]

    # Static slices of the packed (128, 384) weight slab.
    w3h = wrest_ref[:, 0:128]
    w4 = wrest_ref[:, 128:256]
    w5 = wrest_ref[:, 256:384]

    f32 = jnp.float32
    h = jnp.tanh(jnp.dot(x, w1_ref[...], preferred_element_type=f32) + b1)      # (TB, 512)
    h = jnp.tanh(jnp.dot(h, w2_ref[...], preferred_element_type=f32) + b2)      # (TB, 128)
    # concat([h_branch, g]) @ W3  ==  h @ W3h_blockdiag + g @ W3g_concat
    h = jnp.tanh(jnp.dot(h, w3h, preferred_element_type=f32)
                 + jnp.dot(g, w3g_ref[...], preferred_element_type=f32) + b3)   # (TB, 128)
    h = jnp.tanh(jnp.dot(h, w4, preferred_element_type=f32) + b4)               # (TB, 128)
    out_ref[...] = jnp.dot(h, w5, preferred_element_type=f32) + b5              # (TB, 128)


def _round_up(x, m):
    return -(-x // m) * m


def split_model_forward(bert, grid, packed, action_dim, *, tile_b=256):
    """Runs the fused actor+critic forward. Returns (logits (B,A), value (B,1))."""
    B, E = bert.shape
    G = grid.shape[1]
    w1, w2, w3g, wrest, biases = packed

    TB = tile_b if B >= tile_b else _round_up(B, 8)
    Bp = _round_up(B, TB)
    if Bp != B:
        bert = jnp.pad(bert, ((0, Bp - B), (0, 0)))
        grid = jnp.pad(grid, ((0, Bp - B), (0, 0)))
    n_blocks = Bp // TB

    flops = 2 * Bp * (E * 512 + 512 * 128 + 128 * 128 + G * 128
                      + 128 * 128 + 128 * 128)
    transcendentals = Bp * (512 + 128 + 128 + 128)
    bytes_accessed = 4 * (Bp * E + Bp * G + E * 512 + 512 * 128 + G * 128
                          + 128 * 384 + 1024 + Bp * 128)

    out = pl.pallas_call(
        _fused_kernel,
        out_shape=jax.ShapeDtypeStruct((Bp, 128), jnp.float32),
        grid_spec=pltpu.PrefetchScalarGridSpec(
            num_scalar_prefetch=0,
            grid=(n_blocks,),
            in_specs=[
                pl.BlockSpec((TB, E), lambda i: (i, 0)),       # bert activations
                pl.BlockSpec((TB, G), lambda i: (i, 0)),       # grid coords
                pl.BlockSpec((E, 512), lambda i: (0, 0)),      # W1 (resident)
                pl.BlockSpec((512, 128), lambda i: (0, 0)),    # W2 (resident)
                pl.BlockSpec((G, 128), lambda i: (0, 0)),      # W3g (resident)
                pl.BlockSpec((128, 384), lambda i: (0, 0)),    # W3h|W4|W5 (resident)
                pl.BlockSpec((1, 1024), lambda i: (0, 0)),     # packed biases
            ],
            out_specs=pl.BlockSpec((TB, 128), lambda i: (i, 0)),
        ),
        compiler_params=pltpu.CompilerParams(
            dimension_semantics=("parallel",)),
        cost_estimate=pl.CostEstimate(
            flops=flops,
            transcendentals=transcendentals,
            bytes_accessed=bytes_accessed),
    )(bert, grid, w1, w2, w3g, wrest, biases)

    logits = out[:B, :action_dim]
    value = out[:B, action_dim:action_dim + 1]
    return logits, value


# ---------------------------------------------------------------------------
# Host-side parameter construction & packing
# ---------------------------------------------------------------------------
def _init_linear(key, in_dim, out_dim, std):
    kw, _ = jax.random.split(key)
    # TODO(synk): PyTorch layer_init uses orthogonal init; scaled normal is a
    # deterministic stand-in that preserves shapes/semantics of the forward.
    w = std * jax.random.normal(kw, (in_dim, out_dim), jnp.float32) / jnp.sqrt(in_dim)
    b = jnp.zeros((1, out_dim), jnp.float32)
    return w, b


def make_branch_params(key, bert_dim, grid_dim, out_dim, final_std):
    ks = jax.random.split(key, 5)
    w1, b1 = _init_linear(ks[0], bert_dim, 256, jnp.sqrt(2.0))
    w2, b2 = _init_linear(ks[1], 256, 64, jnp.sqrt(2.0))
    w3, b3 = _init_linear(ks[2], 64 + grid_dim, 64, jnp.sqrt(2.0))
    w3h, w3g = w3[:64, :], w3[64:, :]          # fused concat-matmul split
    w4, b4 = _init_linear(ks[3], 64, 64, jnp.sqrt(2.0))
    w5, b5 = _init_linear(ks[4], 64, out_dim, final_std)
    return [w1, b1, w2, b2, w3h, w3g, b3, w4, b4, w5, b5]


def _block_diag(a, b):
    r1, c1 = a.shape
    r2, c2 = b.shape
    out = jnp.zeros((r1 + r2, c1 + c2), a.dtype)
    out = out.at[:r1, :c1].set(a)
    out = out.at[r1:, c1:].set(b)
    return out


def pack_params(actor_params, critic_params, action_dim):
    """Pack actor+critic branch params into the fused kernel layout."""
    aw1, ab1, aw2, ab2, aw3h, aw3g, ab3, aw4, ab4, aw5, ab5 = actor_params
    cw1, cb1, cw2, cb2, cw3h, cw3g, cb3, cw4, cb4, cw5, cb5 = critic_params

    # Layer 1: shared input -> output concat.
    w1 = jnp.concatenate([aw1, cw1], axis=1)                    # (E, 512)
    # Layers 2-4: block-diagonal so actor/critic channels stay separate.
    w2 = _block_diag(aw2, cw2)                                  # (512, 128)
    w3h = _block_diag(aw3h, cw3h)                               # (128, 128)
    w3g = jnp.concatenate([aw3g, cw3g], axis=1)                 # (G, 128)
    w4 = _block_diag(aw4, cw4)                                  # (128, 128)
    # Layer 5: actor logits in cols 0..A-1, critic value in col A; zero-pad to 128 lanes.
    w5 = jnp.zeros((128, 128), jnp.float32)
    w5 = w5.at[:64, :action_dim].set(aw5)
    w5 = w5.at[64:, action_dim].set(cw5[:, 0])
    wrest = jnp.concatenate([w3h, w4, w5], axis=1)              # (128, 384)

    b1 = jnp.concatenate([ab1, cb1], axis=1)                    # (1, 512)
    b2 = jnp.concatenate([ab2, cb2], axis=1)                    # (1, 128)
    b3 = jnp.concatenate([ab3, cb3], axis=1)                    # (1, 128)
    b4 = jnp.concatenate([ab4, cb4], axis=1)                    # (1, 128)
    b5 = jnp.zeros((1, 128), jnp.float32)
    b5 = b5.at[:, :action_dim].set(ab5)
    b5 = b5.at[:, action_dim].set(cb5[0, 0])
    biases = jnp.concatenate([b1, b2, b3, b4, b5], axis=1)      # (1, 1024)

    return (w1, w2, w3g, wrest, biases)


# ---------------------------------------------------------------------------
# Pure-JAX reference (un-fused) for correctness check
# ---------------------------------------------------------------------------
def _ref_branch(bert, grid, p):
    w1, b1, w2, b2, w3h, w3g, b3, w4, b4, w5, b5 = p
    h = jnp.tanh(bert @ w1 + b1)
    h = jnp.tanh(h @ w2 + b2)
    cat = jnp.concatenate([h, grid], axis=1)
    w3 = jnp.concatenate([w3h, w3g], axis=0)
    h = jnp.tanh(cat @ w3 + b3)
    h = jnp.tanh(h @ w4 + b4)
    return h @ w5 + b5


if __name__ == "__main__":
    # Shapes consistent with the module:
    #   obs_space_shapes = {'bert_embeddings': (32,), 'grid_coordinates': (4,)}
    #   action_space_shape = 6
    B, E, G, A = 8, 32, 4, 6

    key = jax.random.PRNGKey(0)
    k_obs_b, k_obs_g, k_actor, k_critic = jax.random.split(key, 4)

    bert = jax.random.normal(k_obs_b, (B, E), jnp.float32)
    grid = jax.random.normal(k_obs_g, (B, G), jnp.float32)

    actor_params = make_branch_params(k_actor, E, G, A, final_std=0.01)
    critic_params = make_branch_params(k_critic, E, G, 1, final_std=1.0)
    packed = pack_params(actor_params, critic_params, A)

    logits, value = split_model_forward(bert, grid, packed, A)
    jax.block_until_ready((logits, value))

    # Categorical(logits=...) is fully determined by the logits; value is (B, 1).
    ref_logits = _ref_branch(bert, grid, actor_params)
    ref_value = _ref_branch(bert, grid, critic_params)

    assert logits.shape == (B, A) and value.shape == (B, 1)
    assert jnp.allclose(logits, ref_logits, atol=1e-5, rtol=1e-5)
    assert jnp.allclose(value, ref_value, atol=1e-5, rtol=1e-5)

    print("KERNEL_OK")
</pallas_src>

<mosaic_0001>
module attributes {stable_mosaic.version = 11 : i64} {
  func.func @_fused_kernel(%arg0: i32, %arg1: memref<8x32xf32, #tpu.memory_space<vmem>>, %arg2: memref<8x4xf32, #tpu.memory_space<vmem>>, %arg3: memref<32x512xf32, #tpu.memory_space<vmem>>, %arg4: memref<512x128xf32, #tpu.memory_space<vmem>>, %arg5: memref<4x128xf32, #tpu.memory_space<vmem>>, %arg6: memref<128x384xf32, #tpu.memory_space<vmem>>, %arg7: memref<1x1024xf32, #tpu.memory_space<vmem>>, %arg8: memref<8x128xf32, #tpu.memory_space<vmem>>) attributes {dimension_semantics = [#tpu.dimension_semantics<parallel>], iteration_bounds = array<i64: 1>, scalar_prefetch = 0 : i64, scratch_operands = 0 : i64, tpu.core_type = #tpu.core_type<tc>, window_params = [{transform_indices = @transform_0, window_bounds = array<i64: 8, 32>}, {transform_indices = @transform_1, window_bounds = array<i64: 8, 4>}, {pipeline_mode = #tpu.pipeline_mode<synchronous>, transform_indices = @transform_2, window_bounds = array<i64: 32, 512>}, {pipeline_mode = #tpu.pipeline_mode<synchronous>, transform_indices = @transform_3, window_bounds = array<i64: 512, 128>}, {pipeline_mode = #tpu.pipeline_mode<synchronous>, transform_indices = @transform_4, window_bounds = array<i64: 4, 128>}, {pipeline_mode = #tpu.pipeline_mode<synchronous>, transform_indices = @transform_5, window_bounds = array<i64: 128, 384>}, {pipeline_mode = #tpu.pipeline_mode<synchronous>, transform_indices = @transform_6, window_bounds = array<i64: 1, 1024>}, {transform_indices = @transform_7, window_bounds = array<i64: 8, 128>}]} {
    %c0 = arith.constant 0 : index
    %c0_0 = arith.constant 0 : index
    %0 = vector.load %arg1[%c0, %c0_0] : memref<8x32xf32, #tpu.memory_space<vmem>>, vector<8x32xf32>
    %c0_1 = arith.constant 0 : index
    %c0_2 = arith.constant 0 : index
    %1 = vector.load %arg2[%c0_1, %c0_2] : memref<8x4xf32, #tpu.memory_space<vmem>>, vector<8x4xf32>
    %c0_3 = arith.constant 0 : index
    %c0_4 = arith.constant 0 : index
    %2 = vector.load %arg7[%c0_3, %c0_4] : memref<1x1024xf32, #tpu.memory_space<vmem>>, vector<1x512xf32>
    %c0_5 = arith.constant 0 : index
    %c512 = arith.constant 512 : index
    %3 = vector.load %arg7[%c0_5, %c512] : memref<1x1024xf32, #tpu.memory_space<vmem>>, vector<1x128xf32>
    %c0_6 = arith.constant 0 : index
    %c640 = arith.constant 640 : index
    %4 = vector.load %arg7[%c0_6, %c640] : memref<1x1024xf32, #tpu.memory_space<vmem>>, vector<1x128xf32>
    %c0_7 = arith.constant 0 : index
    %c768 = arith.constant 768 : index
    %5 = vector.load %arg7[%c0_7, %c768] : memref<1x1024xf32, #tpu.memory_space<vmem>>, vector<1x128xf32>
    %c0_8 = arith.constant 0 : index
    %c896 = arith.constant 896 : index
    %6 = vector.load %arg7[%c0_8, %c896] : memref<1x1024xf32, #tpu.memory_space<vmem>>, vector<1x128xf32>
    %c0_9 = arith.constant 0 : index
    %c0_10 = arith.constant 0 : index
    %7 = vector.load %arg6[%c0_9, %c0_10] : memref<128x384xf32, #tpu.memory_space<vmem>>, vector<128x128xf32>
    %c0_11 = arith.constant 0 : index
    %c128 = arith.constant 128 : index
    %8 = vector.load %arg6[%c0_11, %c128] : memref<128x384xf32, #tpu.memory_space<vmem>>, vector<128x128xf32>
    %c0_12 = arith.constant 0 : index
    %c256 = arith.constant 256 : index
    %9 = vector.load %arg6[%c0_12, %c256] : memref<128x384xf32, #tpu.memory_space<vmem>>, vector<128x128xf32>
    %c0_13 = arith.constant 0 : index
    %c0_14 = arith.constant 0 : index
    %10 = vector.load %arg3[%c0_13, %c0_14] : memref<32x512xf32, #tpu.memory_space<vmem>>, vector<32x512xf32>
    %cst = arith.constant dense<0.000000e+00> : vector<8x512xf32>
    %11 = tpu.matmul %0, %10, %cst {dimension_numbers = #tpu.dot_dimension_numbers<[1], [0], [0], [1], [0, 0, 1, 1], [], []>} : vector<8x32xf32>, vector<32x512xf32>, vector<8x512xf32> -> vector<8x512xf32>
    %12 = vector.broadcast %2 : vector<1x512xf32> to vector<8x512xf32>
    %13 = arith.addf %11, %12 : vector<8x512xf32>
    %14 = math.tanh %13 : vector<8x512xf32>
    %c0_15 = arith.constant 0 : index
    %c0_16 = arith.constant 0 : index
    %15 = vector.load %arg4[%c0_15, %c0_16] : memref<512x128xf32, #tpu.memory_space<vmem>>, vector<512x128xf32>
    %cst_17 = arith.constant dense<0.000000e+00> : vector<8x128xf32>
    %16 = tpu.matmul %14, %15, %cst_17 {dimension_numbers = #tpu.dot_dimension_numbers<[1], [0], [0], [1], [0, 0, 1, 1], [], []>} : vector<8x512xf32>, vector<512x128xf32>, vector<8x128xf32> -> vector<8x128xf32>
    %17 = vector.broadcast %3 : vector<1x128xf32> to vector<8x128xf32>
    %18 = arith.addf %16, %17 : vector<8x128xf32>
    %19 = math.tanh %18 : vector<8x128xf32>
    %cst_18 = arith.constant dense<0.000000e+00> : vector<8x128xf32>
    %20 = tpu.matmul %19, %7, %cst_18 {dimension_numbers = #tpu.dot_dimension_numbers<[1], [0], [0], [1], [0, 0, 1, 1], [], []>} : vector<8x128xf32>, vector<128x128xf32>, vector<8x128xf32> -> vector<8x128xf32>
    %c0_19 = arith.constant 0 : index
    %c0_20 = arith.constant 0 : index
    %21 = vector.load %arg5[%c0_19, %c0_20] : memref<4x128xf32, #tpu.memory_space<vmem>>, vector<4x128xf32>
    %cst_21 = arith.constant dense<0.000000e+00> : vector<8x128xf32>
    %22 = tpu.matmul %1, %21, %cst_21 {dimension_numbers = #tpu.dot_dimension_numbers<[1], [0], [0], [1], [0, 0, 1, 1], [], []>} : vector<8x4xf32>, vector<4x128xf32>, vector<8x128xf32> -> vector<8x128xf32>
    %23 = arith.addf %20, %22 : vector<8x128xf32>
    %24 = vector.broadcast %4 : vector<1x128xf32> to vector<8x128xf32>
    %25 = arith.addf %23, %24 : vector<8x128xf32>
    %26 = math.tanh %25 : vector<8x128xf32>
    %cst_22 = arith.constant dense<0.000000e+00> : vector<8x128xf32>
    %27 = tpu.matmul %26, %8, %cst_22 {dimension_numbers = #tpu.dot_dimension_numbers<[1], [0], [0], [1], [0, 0, 1, 1], [], []>} : vector<8x128xf32>, vector<128x128xf32>, vector<8x128xf32> -> vector<8x128xf32>
    %28 = vector.broadcast %5 : vector<1x128xf32> to vector<8x128xf32>
    %29 = arith.addf %27, %28 : vector<8x128xf32>
    %30 = math.tanh %29 : vector<8x128xf32>
    %cst_23 = arith.constant dense<0.000000e+00> : vector<8x128xf32>
    %31 = tpu.matmul %30, %9, %cst_23 {dimension_numbers = #tpu.dot_dimension_numbers<[1], [0], [0], [1], [0, 0, 1, 1], [], []>} : vector<8x128xf32>, vector<128x128xf32>, vector<8x128xf32> -> vector<8x128xf32>
    %32 = vector.broadcast %6 : vector<1x128xf32> to vector<8x128xf32>
    %33 = arith.addf %31, %32 : vector<8x128xf32>
    %c0_24 = arith.constant 0 : index
    %c0_25 = arith.constant 0 : index
    %34 = vector.load %arg8[%c0_24, %c0_25] : memref<8x128xf32, #tpu.memory_space<vmem>>, vector<8x128xf32>
    tpu.vector_store %arg8[%c0_24, %c0_25], %33 {strides = array<i32>} : memref<8x128xf32, #tpu.memory_space<vmem>>, vector<8x128xf32>,
    return
  }
  func.func @transform_0(%arg0: i32) -> (i32, i32) {
    %c0_i32 = arith.constant 0 : i32
    %c0_i32_0 = arith.constant 0 : i32
    return %arg0, %c0_i32 : i32, i32
  }
  func.func @transform_1(%arg0: i32) -> (i32, i32) {
    %c0_i32 = arith.constant 0 : i32
    %c0_i32_0 = arith.constant 0 : i32
    return %arg0, %c0_i32 : i32, i32
  }
  func.func @transform_2(%arg0: i32) -> (i32, i32) {
    %c0_i32 = arith.constant 0 : i32
    %c0_i32_0 = arith.constant 0 : i32
    %c0_i32_1 = arith.constant 0 : i32
    return %c0_i32, %c0_i32_0 : i32, i32
  }
  func.func @transform_3(%arg0: i32) -> (i32, i32) {
    %c0_i32 = arith.constant 0 : i32
    %c0_i32_0 = arith.constant 0 : i32
    %c0_i32_1 = arith.constant 0 : i32
    return %c0_i32, %c0_i32_0 : i32, i32
  }
  func.func @transform_4(%arg0: i32) -> (i32, i32) {
    %c0_i32 = arith.constant 0 : i32
    %c0_i32_0 = arith.constant 0 : i32
    %c0_i32_1 = arith.constant 0 : i32
    return %c0_i32, %c0_i32_0 : i32, i32
  }
  func.func @transform_5(%arg0: i32) -> (i32, i32) {
    %c0_i32 = arith.constant 0 : i32
    %c0_i32_0 = arith.constant 0 : i32
    %c0_i32_1 = arith.constant 0 : i32
    return %c0_i32, %c0_i32_0 : i32, i32
  }
  func.func @transform_6(%arg0: i32) -> (i32, i32) {
    %c0_i32 = arith.constant 0 : i32
    %c0_i32_0 = arith.constant 0 : i32
    %c0_i32_1 = arith.constant 0 : i32
    return %c0_i32, %c0_i32_0 : i32, i32
  }
  func.func @transform_7(%arg0: i32) -> (i32, i32) {
    %c0_i32 = arith.constant 0 : i32
    %c0_i32_0 = arith.constant 0 : i32
    return %arg0, %c0_i32 : i32, i32
  }
}

</mosaic_0001>

<llo_original>
// kernel: tpu_custom_call.1
$region0: #{tpu_custom_call.1}
  #allocation0 [shape = 'u32[]', space=smem, size = 0x4, offset = 0x4, fixed_abs, tag = 'smem constant byte address 0x4 - core index']
  #allocation1 [shape = 'u32[144,128]{1,0:T(1,128)}', space=vmem, size = 0x12000, scoped, tag = 'internal scratch']
  %s0 = inlined_call_operand.vmem [shape: f32[8,32], index: 0, kind: input, shape index: {}]
  %s1 = inlined_call_operand.vmem [shape: f32[8,4], index: 1, kind: input, shape index: {}]
  %s2 = inlined_call_operand.hbm [shape: f32[32,512], index: 2, kind: input, shape index: {}]
  %s3 = inlined_call_operand.hbm [shape: f32[512,128], index: 3, kind: input, shape index: {}]
  %s4 = inlined_call_operand.vmem [shape: f32[4,128], index: 4, kind: input, shape index: {}]
  %s5 = inlined_call_operand.hbm [shape: f32[128,384], index: 5, kind: input, shape index: {}]
  %s6 = inlined_call_operand.vmem [shape: f32[1,1024], index: 6, kind: input, shape index: {}]
  %s7 = inlined_call_operand.hbm [shape: f32[8,128], index: 7, kind: output, shape index: {}]
  %s8 = sld [smem:[#allocation0]]
  $region50: #{tpu_custom_call.1} parent=0
    _
  %s10 = ssub.s32 1, %s8
  %s11 = scalar_select 0, %s10, %s8
  $region1: #{tpu_custom_call.1} parent=0
    #allocation2 [shape = 'u8[65536]{0}', space=vmem, size = 0x10000, scoped, tag = 'input window, operand 2, single buffered']
    #allocation3 [shape = 's32[1]{0}', space=sflag, size = 0x4, scoped, tag = 'scoped memory for tpu_custom_call.1']
    #allocation4 [shape = 's32[1]{0}', space=sflag, size = 0x4, scoped, tag = 'scoped memory for tpu_custom_call.1']
    #allocation5 [shape = 'u8[262144]{0}', space=vmem, size = 0x40000, scoped, tag = 'input window, operand 3, single buffered']
    #allocation6 [shape = 's32[1]{0}', space=sflag, size = 0x4, scoped, tag = 'scoped memory for tpu_custom_call.1']
    #allocation7 [shape = 'u8[196608]{0}', space=vmem, size = 0x30000, scoped, tag = 'input window, operand 5, single buffered']
    #allocation8 [shape = 'u8[4096]{0}', space=vmem, size = 0x1000, scoped, tag = 'output window, operand 0, single buffered']
    %12 = vsyncpa [#allocation3], 0
    %13 = vsyncpa [#allocation6], 0
    %14 = vsyncpa [#allocation4], 0
    // Predicated region
    $region2: #{tpu_custom_call.1} parent=1 // pred_check
      _
    $region3: #{tpu_custom_call.1} parent=1 // pred_check_branch
      %16 = sbr.rel (0) target = $region5
    $region4: #{tpu_custom_call.1} parent=1 // pred_region
      _
    $region5: #{tpu_custom_call.1} parent=1 // pred_fallthru
      _
    // Predicated region
    $region6: #{tpu_custom_call.1} parent=1 // pred_check
      _
    $region7: #{tpu_custom_call.1} parent=1 // pred_check_branch
      %18 = sbr.rel (0) target = $region9
    $region8: #{tpu_custom_call.1} parent=1 // pred_region
      _
    $region9: #{tpu_custom_call.1} parent=1 // pred_fallthru
      _
    // Predicated region
    $region10: #{tpu_custom_call.1} parent=1 // pred_check
      _
    $region11: #{tpu_custom_call.1} parent=1 // pred_check_branch
      %20 = sbr.rel (0) target = $region13
    $region12: #{tpu_custom_call.1} parent=1 // pred_region
      %s22 = ssub.s32 2048, 2048
      %23 = vsyncadd [#allocation3], %s22
      %s24 = sshll.u32 [#allocation2], 4
      %s25 = int_to_ptr.vmem [resolvable:$true] %s24
      %30 = dma.hbm_to_vmem [thread:$0]  %s2, 2048, %s25, [#allocation3], 512, 512, 32
    $region13: #{tpu_custom_call.1} parent=1 // pred_fallthru
      _
    // Predicated region
    $region14: #{tpu_custom_call.1} parent=1 // pred_check
      _
    $region15: #{tpu_custom_call.1} parent=1 // pred_check_branch
      %32 = sbr.rel (0) target = $region17
    $region16: #{tpu_custom_call.1} parent=1 // pred_region
      %s34 = ssub.s32 8192, 8192
      %35 = vsyncadd [#allocation6], %s34
      %s36 = sshll.u32 [#allocation5], 4
      %s37 = int_to_ptr.vmem [resolvable:$true] %s36
      %42 = dma.hbm_to_vmem [thread:$0]  %s3, 8192, %s37, [#allocation6], 128, 128, 8
    $region17: #{tpu_custom_call.1} parent=1 // pred_fallthru
      _
    // Predicated region
    $region18: #{tpu_custom_call.1} parent=1 // pred_check
      _
    $region19: #{tpu_custom_call.1} parent=1 // pred_check_branch
      %44 = sbr.rel (0) target = $region21
    $region20: #{tpu_custom_call.1} parent=1 // pred_region
      _
    $region21: #{tpu_custom_call.1} parent=1 // pred_fallthru
      _
    // Predicated region
    $region22: #{tpu_custom_call.1} parent=1 // pred_check
      _
    $region23: #{tpu_custom_call.1} parent=1 // pred_check_branch
      %46 = sbr.rel (0) target = $region25
    $region24: #{tpu_custom_call.1} parent=1 // pred_region
      %s48 = ssub.s32 6144, 6144
      %49 = vsyncadd [#allocation6], %s48
      %s50 = sshll.u32 [#allocation7], 4
      %s51 = int_to_ptr.vmem [resolvable:$true] %s50
      %56 = dma.hbm_to_vmem [thread:$0]  %s5, 6144, %s51, [#allocation6], 384, 384, 24
    $region25: #{tpu_custom_call.1} parent=1 // pred_fallthru
      _
    // Predicated region
    $region26: #{tpu_custom_call.1} parent=1 // pred_check
      _
    $region27: #{tpu_custom_call.1} parent=1 // pred_check_branch
      %58 = sbr.rel (0) target = $region29
    $region28: #{tpu_custom_call.1} parent=1 // pred_region
      _
    $region29: #{tpu_custom_call.1} parent=1 // pred_fallthru
      _
    // Predicated region
    $region30: #{tpu_custom_call.1} parent=1 // pred_check
      _
    $region31: #{tpu_custom_call.1} parent=1 // pred_check_branch
      %60 = sbr.rel (0) target = $region33
    $region32: #{tpu_custom_call.1} parent=1 // pred_region
      %61 = dma.done [#allocation3], 2048
    $region33: #{tpu_custom_call.1} parent=1 // pred_fallthru
      _
    // Predicated region
    $region34: #{tpu_custom_call.1} parent=1 // pred_check
      _
    $region35: #{tpu_custom_call.1} parent=1 // pred_check_branch
      %63 = sbr.rel (0) target = $region37
    $region36: #{tpu_custom_call.1} parent=1 // pred_region
      %64 = dma.done [#allocation6], 8192
    $region37: #{tpu_custom_call.1} parent=1 // pred_fallthru
      _
    // Predicated region
    $region38: #{tpu_custom_call.1} parent=1 // pred_check
      _
    $region39: #{tpu_custom_call.1} parent=1 // pred_check_branch
      %66 = sbr.rel (0) target = $region41
    $region40: #{tpu_custom_call.1} parent=1 // pred_region
      %67 = dma.done [#allocation6], 6144
    $region41: #{tpu_custom_call.1} parent=1 // pred_fallthru
      _
    %v68 = vld [vmem:[%s0] sm:$0xff]
    %v69 = vld [vmem:[%s1] sm:$0xff]
    %v70 = vld [vmem:[%s6] sm:$0xf]
    %v71 = vld [vmem:[%s6 + $0x4] sm:$0x1]
    %v72 = vld [vmem:[%s6 + $0x5] sm:$0x1]
    %v73 = vld [vmem:[%s6 + $0x6] sm:$0x1]
    %v74 = vld [vmem:[%s6 + $0x7] sm:$0x1]
    %v75 = vld [vmem:[#allocation7] sm:$0xff]
    %v76 = vld [vmem:[#allocation7 + $0x18] sm:$0xff]
    %v77 = vld [vmem:[#allocation7 + $0x30] sm:$0xff]
    %v78 = vld [vmem:[#allocation7 + $0x48] sm:$0xff]
    %v79 = vld [vmem:[#allocation7 + $0x60] sm:$0xff]
    %v80 = vld [vmem:[#allocation7 + $0x78] sm:$0xff]
    %v81 = vld [vmem:[#allocation7 + $0x90] sm:$0xff]
    %v82 = vld [vmem:[#allocation7 + $0xa8] sm:$0xff]
    %v83 = vld [vmem:[#allocation7 + $0xc0] sm:$0xff]
    %v84 = vld [vmem:[#allocation7 + $0xd8] sm:$0xff]
    %v85 = vld [vmem:[#allocation7 + $0xf0] sm:$0xff]
    %v86 = vld [vmem:[#allocation7 + $0x108] sm:$0xff]
    %v87 = vld [vmem:[#allocation7 + $0x120] sm:$0xff]
    %v88 = vld [vmem:[#allocation7 + $0x138] sm:$0xff]
    %v89 = vld [vmem:[#allocation7 + $0x150] sm:$0xff]
    %v90 = vld [vmem:[#allocation7 + $0x168] sm:$0xff]
    %v91 = vld [vmem:[#allocation7 + $0x8] sm:$0xff]
    %v92 = vld [vmem:[#allocation7 + $0x20] sm:$0xff]
    %v93 = vld [vmem:[#allocation7 + $0x38] sm:$0xff]
    %v94 = vld [vmem:[#allocation7 + $0x50] sm:$0xff]
    %v95 = vld [vmem:[#allocation7 + $0x68] sm:$0xff]
    %v96 = vld [vmem:[#allocation7 + $0x80] sm:$0xff]
    %v97 = vld [vmem:[#allocation7 + $0x98] sm:$0xff]
    %v98 = vld [vmem:[#allocation7 + $0xb0] sm:$0xff]
    %v99 = vld [vmem:[#allocation7 + $0xc8] sm:$0xff]
    %v100 = vld [vmem:[#allocation7 + $0xe0] sm:$0xff]
    %v101 = vld [vmem:[#allocation7 + $0xf8] sm:$0xff]
    %v102 = vld [vmem:[#allocation7 + $0x110] sm:$0xff]
    %v103 = vld [vmem:[#allocation7 + $0x128] sm:$0xff]
    %v104 = vld [vmem:[#allocation7 + $0x140] sm:$0xff]
    %v105 = vld [vmem:[#allocation7 + $0x158] sm:$0xff]
    %v106 = vld [vmem:[#allocation7 + $0x170] sm:$0xff]
    %v107 = vld [vmem:[#allocation7 + $0x10] sm:$0xff]
    %v108 = vld [vmem:[#allocation7 + $0x28] sm:$0xff]
    %v109 = vld [vmem:[#allocation7 + $0x40] sm:$0xff]
    %v110 = vld [vmem:[#allocation7 + $0x58] sm:$0xff]
    %v111 = vld [vmem:[#allocation7 + $0x70] sm:$0xff]
    %v112 = vld [vmem:[#allocation7 + $0x88] sm:$0xff]
    %v113 = vld [vmem:[#allocation7 + $0xa0] sm:$0xff]
    %v114 = vld [vmem:[#allocation7 + $0xb8] sm:$0xff]
    %v115 = vld [vmem:[#allocation7 + $0xd0] sm:$0xff]
    %v116 = vld [vmem:[#allocation7 + $0xe8] sm:$0xff]
    %v117 = vld [vmem:[#allocation7 + $0x100] sm:$0xff]
    %v118 = vld [vmem:[#allocation7 + $0x118] sm:$0xff]
    %v119 = vld [vmem:[#allocation7 + $0x130] sm:$0xff]
    %v120 = vld [vmem:[#allocation7 + $0x148] sm:$0xff]
    %v121 = vld [vmem:[#allocation7 + $0x160] sm:$0xff]
    %v122 = vld [vmem:[#allocation7 + $0x178] sm:$0xff]
    %v123 = vld [vmem:[#allocation2] sm:$0xff]
    %v124 = vld [vmem:[#allocation2 + $0x8] sm:$0xff]
    %v125 = vld [vmem:[#allocation2 + $0x10] sm:$0xff]
    %v126 = vld [vmem:[#allocation2 + $0x18] sm:$0xff]
    %v127 = vld [vmem:[#allocation2 + $0x20] sm:$0xff]
    %v128 = vld [vmem:[#allocation2 + $0x28] sm:$0xff]
    %v129 = vld [vmem:[#allocation2 + $0x30] sm:$0xff]
    %v130 = vld [vmem:[#allocation2 + $0x38] sm:$0xff]
    %v131 = vld [vmem:[#allocation2 + $0x40] sm:$0xff]
    %v132 = vld [vmem:[#allocation2 + $0x48] sm:$0xff]
    %v133 = vld [vmem:[#allocation2 + $0x50] sm:$0xff]
    %v134 = vld [vmem:[#allocation2 + $0x58] sm:$0xff]
    %v135 = vld [vmem:[#allocation2 + $0x60] sm:$0xff]
    %v136 = vld [vmem:[#allocation2 + $0x68] sm:$0xff]
    %v137 = vld [vmem:[#allocation2 + $0x70] sm:$0xff]
    %v138 = vld [vmem:[#allocation2 + $0x78] sm:$0xff]
    %v140 = vlaneseq
    %v141 = vshrl.u32 %v140, 7
    %v142 = vsub.s32 0, %v141
    %v143 = vrot.slane %v70, %v142
    %v144 = vlaneseq
    %v145 = vshrl.u32 %v144, 7
    %v146 = vsub.s32 1, %v145
    %v147 = vrot.slane %v70, %v146
    %v148 = vlaneseq
    %v149 = vshrl.u32 %v148, 7
    %v150 = vsub.s32 2, %v149
    %v151 = vrot.slane %v70, %v150
    %v152 = vlaneseq
    %v153 = vshrl.u32 %v152, 7
    %v154 = vsub.s32 3, %v153
    %v155 = vrot.slane %v70, %v154
    %vm160 = vcmask 261120
    %v162 = vsel %vm160, %v68, 0
    %164 = vmatprep.subr.mxu0 %v124
    %165 = vmatpush1.msra.mxu0 %v123
    %166 = vmatprep.subr.mxu0 %v128
    %167 = vmatpush1.msra.mxu0 %v127
    %168 = vmatprep.subr.mxu0 %v132
    %169 = vmatpush1.msra.mxu0 %v131
    %170 = vmatprep.subr.mxu0 %v136
    %171 = vmatpush1.msra.mxu0 %v135
    %172 = vmatprep.subr.mxu0 0.0
    %173 = vmatpush1.msra.mxu0 0.0
    %174 = vmatprep.subr.mxu0 0.0
    %175 = vmatpush1.msra.mxu0 0.0
    %176 = vmatprep.subr.mxu0 0.0
    %177 = vmatpush1.msra.mxu0 0.0
    %178 = vmatprep.subr.mxu0 0.0
    %179 = vmatpush1.msra.mxu0 0.0
    %180 = vmatprep.subr.mxu0 0.0
    %181 = vmatpush1.msra.mxu0 0.0
    %182 = vmatprep.subr.mxu0 0.0
    %183 = vmatpush1.msra.mxu0 0.0
    %184 = vmatprep.subr.mxu0 0.0
    %185 = vmatpush1.msra.mxu0 0.0
    %186 = vmatprep.subr.mxu0 0.0
    %187 = vmatpush1.msra.mxu0 0.0
    %188 = vmatprep.subr.mxu0 0.0
    %189 = vmatpush1.msra.mxu0 0.0
    %190 = vmatprep.subr.mxu0 0.0
    %191 = vmatpush1.msra.mxu0 0.0
    %192 = vmatprep.subr.mxu0 0.0
    %193 = vmatpush1.msra.mxu0 0.0
    %194 = vmatprep.subr.mxu0 0.0
    %195 = vmatpush1.msra.mxu0 0.0
    %196 = vmatprep.subr.mxu0 0.0
    %197 = vmatpush1.msra.mxu0 0.0
    %198 = vmatprep.subr.mxu0 0.0
    %199 = vmatpush1.msra.mxu0 0.0
    %200 = vmatprep.subr.mxu0 0.0
    %201 = vmatpush1.msra.mxu0 0.0
    %202 = vmatprep.subr.mxu0 0.0
    %203 = vmatpush1.msra.mxu0 0.0
    %204 = vmatprep.subr.mxu0 0.0
    %205 = vmatpush1.msra.mxu0 0.0
    %206 = vmatprep.subr.mxu0 0.0
    %207 = vmatpush1.msra.mxu0 0.0
    %208 = vmatprep.subr.mxu0 0.0
    %209 = vmatpush1.msra.mxu0 0.0
    %210 = vmatprep.subr.mxu0 0.0
    %211 = vmatpush1.msra.mxu0 0.0
    %212 = vmatprep.subr.mxu0 0.0
    %213 = vmatpush1.msra.mxu0 0.0
    %214 = vmatprep.subr.mxu0 0.0
    %215 = vmatpush1.msra.mxu0 0.0
    %216 = vmatprep.subr.mxu0 0.0
    %217 = vmatpush1.msra.mxu0 0.0
    %218 = vmatprep.subr.mxu0 0.0
    %219 = vmatpush1.msra.mxu0 0.0
    %220 = vmatprep.subr.mxu0 0.0
    %221 = vmatpush1.msra.mxu0 0.0
    %222 = vmatprep.subr.mxu0 0.0
    %223 = vmatpush1.msra.mxu0 0.0
    %224 = vmatprep.subr.mxu0 0.0
    %225 = vmatpush1.msra.mxu0 0.0
    %226 = vmatprep.subr.mxu0 0.0
    %227 = vmatpush1.msra.mxu0 0.0
    %228 = vmatprep.mubr.f32.mxu0 0.0
    %229 = vmatmul.mubr.f32.gmra.mrb[0].mxu0 %v162
    %v230 = vpop.f32.mrb[0].mxu0
    %v231 = vadd.f32 %v143, %v230
    %v232 = vpop.f32.mrb[0].mxu0
    %v233 = vadd.f32 %v147, %v232
    %234 = vdwg.mxu0
    %235 = vmatprep.subr.mxu0 %v126
    %236 = vmatpush1.msra.mxu0 %v125
    %237 = vmatprep.subr.mxu0 %v130
    %238 = vmatpush1.msra.mxu0 %v129
    %239 = vmatprep.subr.mxu0 %v134
    %240 = vmatpush1.msra.mxu0 %v133
    %241 = vmatprep.subr.mxu0 %v138
    %242 = vmatpush1.msra.mxu0 %v137
    %243 = vmatprep.subr.mxu0 0.0
    %244 = vmatpush1.msra.mxu0 0.0
    %245 = vmatprep.subr.mxu0 0.0
    %246 = vmatpush1.msra.mxu0 0.0
    %247 = vmatprep.subr.mxu0 0.0
    %248 = vmatpush1.msra.mxu0 0.0
    %249 = vmatprep.subr.mxu0 0.0
    %250 = vmatpush1.msra.mxu0 0.0
    %251 = vmatprep.subr.mxu0 0.0
    %252 = vmatpush1.msra.mxu0 0.0
    %253 = vmatprep.subr.mxu0 0.0
    %254 = vmatpush1.msra.mxu0 0.0
    %255 = vmatprep.subr.mxu0 0.0
    %256 = vmatpush1.msra.mxu0 0.0
    %257 = vmatprep.subr.mxu0 0.0
    %258 = vmatpush1.msra.mxu0 0.0
    %259 = vmatprep.subr.mxu0 0.0
    %260 = vmatpush1.msra.mxu0 0.0
    %261 = vmatprep.subr.mxu0 0.0
    %262 = vmatpush1.msra.mxu0 0.0
    %263 = vmatprep.subr.mxu0 0.0
    %264 = vmatpush1.msra.mxu0 0.0
    %265 = vmatprep.subr.mxu0 0.0
    %266 = vmatpush1.msra.mxu0 0.0
    %267 = vmatprep.subr.mxu0 0.0
    %268 = vmatpush1.msra.mxu0 0.0
    %269 = vmatprep.subr.mxu0 0.0
    %270 = vmatpush1.msra.mxu0 0.0
    %271 = vmatprep.subr.mxu0 0.0
    %272 = vmatpush1.msra.mxu0 0.0
    %273 = vmatprep.subr.mxu0 0.0
    %274 = vmatpush1.msra.mxu0 0.0
    %275 = vmatprep.subr.mxu0 0.0
    %276 = vmatpush1.msra.mxu0 0.0
    %277 = vmatprep.subr.mxu0 0.0
    %278 = vmatpush1.msra.mxu0 0.0
    %279 = vmatprep.subr.mxu0 0.0
    %280 = vmatpush1.msra.mxu0 0.0
    %281 = vmatprep.subr.mxu0 0.0
    %282 = vmatpush1.msra.mxu0 0.0
    %283 = vmatprep.subr.mxu0 0.0
    %284 = vmatpush1.msra.mxu0 0.0
    %285 = vmatprep.subr.mxu0 0.0
    %286 = vmatpush1.msra.mxu0 0.0
    %287 = vmatprep.subr.mxu0 0.0
    %288 = vmatpush1.msra.mxu0 0.0
    %289 = vmatprep.subr.mxu0 0.0
    %290 = vmatpush1.msra.mxu0 0.0
    %291 = vmatprep.subr.mxu0 0.0
    %292 = vmatpush1.msra.mxu0 0.0
    %293 = vmatprep.subr.mxu0 0.0
    %294 = vmatpush1.msra.mxu0 0.0
    %295 = vmatprep.subr.mxu0 0.0
    %296 = vmatpush1.msra.mxu0 0.0
    %297 = vmatprep.subr.mxu0 0.0
    %298 = vmatpush1.msra.mxu0 0.0
    %299 = vmatprep.mubr.f32.mxu0 0.0
    %300 = vmatmul.mubr.f32.gmra.mrb[0].mxu0 %v162
    %v301 = vpop.f32.mrb[0].mxu0
    %v302 = vadd.f32 %v151, %v301
    %v303 = vpop.f32.mrb[0].mxu0
    %v304 = vadd.f32 %v155, %v303
    %305 = vdwg.mxu0
    %v306 = vtanh.pop %v231
    %v307 = vtanh.pop %v233
    %v308 = vtanh.pop %v302
    %v309 = vtanh.pop %v304
    %v310 = vld [vmem:[#allocation5] sm:$0xff]
    %v311 = vld [vmem:[#allocation5 + $0x8] sm:$0xff]
    %v312 = vld [vmem:[#allocation5 + $0x10] sm:$0xff]
    %v313 = vld [vmem:[#allocation5 + $0x18] sm:$0xff]
    %v314 = vld [vmem:[#allocation5 + $0x20] sm:$0xff]
    %v315 = vld [vmem:[#allocation5 + $0x28] sm:$0xff]
    %v316 = vld [vmem:[#allocation5 + $0x30] sm:$0xff]
    %v317 = vld [vmem:[#allocation5 + $0x38] sm:$0xff]
    %v318 = vld [vmem:[#allocation5 + $0x40] sm:$0xff]
    %v319 = vld [vmem:[#allocation5 + $0x48] sm:$0xff]
    %v320 = vld [vmem:[#allocation5 + $0x50] sm:$0xff]
    %v321 = vld [vmem:[#allocation5 + $0x58] sm:$0xff]
    %v322 = vld [vmem:[#allocation5 + $0x60] sm:$0xff]
    %v323 = vld [vmem:[#allocation5 + $0x68] sm:$0xff]
    %v324 = vld [vmem:[#allocation5 + $0x70] sm:$0xff]
    %v325 = vld [vmem:[#allocation5 + $0x78] sm:$0xff]
    %v326 = vld [vmem:[#allocation5 + $0x80] sm:$0xff]
    %v327 = vld [vmem:[#allocation5 + $0x88] sm:$0xff]
    %v328 = vld [vmem:[#allocation5 + $0x90] sm:$0xff]
    %v329 = vld [vmem:[#allocation5 + $0x98] sm:$0xff]
    %v330 = vld [vmem:[#allocation5 + $0xa0] sm:$0xff]
    %v331 = vld [vmem:[#allocation5 + $0xa8] sm:$0xff]
    %v332 = vld [vmem:[#allocation5 + $0xb0] sm:$0xff]
    %v333 = vld [vmem:[#allocation5 + $0xb8] sm:$0xff]
    %v334 = vld [vmem:[#allocation5 + $0xc0] sm:$0xff]
    %v335 = vld [vmem:[#allocation5 + $0xc8] sm:$0xff]
    %v336 = vld [vmem:[#allocation5 + $0xd0] sm:$0xff]
    %v337 = vld [vmem:[#allocation5 + $0xd8] sm:$0xff]
    %v338 = vld [vmem:[#allocation5 + $0xe0] sm:$0xff]
    %v339 = vld [vmem:[#allocation5 + $0xe8] sm:$0xff]
    %v340 = vld [vmem:[#allocation5 + $0xf0] sm:$0xff]
    %v341 = vld [vmem:[#allocation5 + $0xf8] sm:$0xff]
    %v342 = vld [vmem:[#allocation5 + $0x100] sm:$0xff]
    %v343 = vld [vmem:[#allocation5 + $0x108] sm:$0xff]
    %v344 = vld [vmem:[#allocation5 + $0x110] sm:$0xff]
    %v345 = vld [vmem:[#allocation5 + $0x118] sm:$0xff]
    %v346 = vld [vmem:[#allocation5 + $0x120] sm:$0xff]
    %v347 = vld [vmem:[#allocation5 + $0x128] sm:$0xff]
    %v348 = vld [vmem:[#allocation5 + $0x130] sm:$0xff]
    %v349 = vld [vmem:[#allocation5 + $0x138] sm:$0xff]
    %v350 = vld [vmem:[#allocation5 + $0x140] sm:$0xff]
    %v351 = vld [vmem:[#allocation5 + $0x148] sm:$0xff]
    %v352 = vld [vmem:[#allocation5 + $0x150] sm:$0xff]
    %v353 = vld [vmem:[#allocation5 + $0x158] sm:$0xff]
    %v354 = vld [vmem:[#allocation5 + $0x160] sm:$0xff]
    %v355 = vld [vmem:[#allocation5 + $0x168] sm:$0xff]
    %v356 = vld [vmem:[#allocation5 + $0x170] sm:$0xff]
    %v357 = vld [vmem:[#allocation5 + $0x178] sm:$0xff]
    %v358 = vld [vmem:[#allocation5 + $0x180] sm:$0xff]
    %v359 = vld [vmem:[#allocation5 + $0x188] sm:$0xff]
    %v360 = vld [vmem:[#allocation5 + $0x190] sm:$0xff]
    %v361 = vld [vmem:[#allocation5 + $0x198] sm:$0xff]
    %v362 = vld [vmem:[#allocation5 + $0x1a0] sm:$0xff]
    %v363 = vld [vmem:[#allocation5 + $0x1a8] sm:$0xff]
    %v364 = vld [vmem:[#allocation5 + $0x1b0] sm:$0xff]
    %v365 = vld [vmem:[#allocation5 + $0x1b8] sm:$0xff]
    %v366 = vld [vmem:[#allocation5 + $0x1c0] sm:$0xff]
    %v367 = vld [vmem:[#allocation5 + $0x1c8] sm:$0xff]
    %v368 = vld [vmem:[#allocation5 + $0x1d0] sm:$0xff]
    %v369 = vld [vmem:[#allocation5 + $0x1d8] sm:$0xff]
    %v370 = vld [vmem:[#allocation5 + $0x1e0] sm:$0xff]
    %v371 = vld [vmem:[#allocation5 + $0x1e8] sm:$0xff]
    %v372 = vld [vmem:[#allocation5 + $0x1f0] sm:$0xff]
    %v373 = vld [vmem:[#allocation5 + $0x1f8] sm:$0xff]
    %v375 = vlaneseq
    %v376 = vshrl.u32 %v375, 7
    %v377 = vsub.s32 0, %v376
    %v378 = vrot.slane %v71, %v377
    %380 = vmatprep.subr.mxu0 0.0
    %381 = vmatpush1.msra.mxu0 %v310
    %382 = vmatprep.subr.mxu0 0.0
    %383 = vmatpush1.msra.mxu0 %v311
    %384 = vmatprep.subr.mxu0 0.0
    %385 = vmatpush1.msra.mxu0 %v312
    %386 = vmatprep.subr.mxu0 0.0
    %387 = vmatpush1.msra.mxu0 %v313
    %388 = vmatprep.subr.mxu0 0.0
    %389 = vmatpush1.msra.mxu0 %v314
    %390 = vmatprep.subr.mxu0 0.0
    %391 = vmatpush1.msra.mxu0 %v315
    %392 = vmatprep.subr.mxu0 0.0
    %393 = vmatpush1.msra.mxu0 %v316
    %394 = vmatprep.subr.mxu0 0.0
    %395 = vmatpush1.msra.mxu0 %v317
    %396 = vmatprep.subr.mxu0 0.0
    %397 = vmatpush1.msra.mxu0 %v318
    %398 = vmatprep.subr.mxu0 0.0
    %399 = vmatpush1.msra.mxu0 %v319
    %400 = vmatprep.subr.mxu0 0.0
    %401 = vmatpush1.msra.mxu0 %v320
    %402 = vmatprep.subr.mxu0 0.0
    %403 = vmatpush1.msra.mxu0 %v321
    %404 = vmatprep.subr.mxu0 0.0
    %405 = vmatpush1.msra.mxu0 %v322
    %406 = vmatprep.subr.mxu0 0.0
    %407 = vmatpush1.msra.mxu0 %v323
    %408 = vmatprep.subr.mxu0 0.0
    %409 = vmatpush1.msra.mxu0 %v324
    %410 = vmatprep.subr.mxu0 0.0
    %411 = vmatpush1.msra.mxu0 %v325
    %412 = vmatprep.subr.mxu0 0.0
    %413 = vmatpush1.msra.mxu0 %v326
    %414 = vmatprep.subr.mxu0 0.0
    %415 = vmatpush1.msra.mxu0 %v327
    %416 = vmatprep.subr.mxu0 0.0
    %417 = vmatpush1.msra.mxu0 %v328
    %418 = vmatprep.subr.mxu0 0.0
    %419 = vmatpush1.msra.mxu0 %v329
    %420 = vmatprep.subr.mxu0 0.0
    %421 = vmatpush1.msra.mxu0 %v330
    %422 = vmatprep.subr.mxu0 0.0
    %423 = vmatpush1.msra.mxu0 %v331
    %424 = vmatprep.subr.mxu0 0.0
    %425 = vmatpush1.msra.mxu0 %v332
    %426 = vmatprep.subr.mxu0 0.0
    %427 = vmatpush1.msra.mxu0 %v333
    %428 = vmatprep.subr.mxu0 0.0
    %429 = vmatpush1.msra.mxu0 %v334
    %430 = vmatprep.subr.mxu0 0.0
    %431 = vmatpush1.msra.mxu0 %v335
    %432 = vmatprep.subr.mxu0 0.0
    %433 = vmatpush1.msra.mxu0 %v336
    %434 = vmatprep.subr.mxu0 0.0
    %435 = vmatpush1.msra.mxu0 %v337
    %436 = vmatprep.subr.mxu0 0.0
    %437 = vmatpush1.msra.mxu0 %v338
    %438 = vmatprep.subr.mxu0 0.0
    %439 = vmatpush1.msra.mxu0 %v339
    %440 = vmatprep.subr.mxu0 0.0
    %441 = vmatpush1.msra.mxu0 %v340
    %442 = vmatprep.subr.mxu0 0.0
    %443 = vmatpush1.msra.mxu0 %v341
    %444 = vmatprep.mubr.f32.mxu0 %v307
    %445 = vmatmul.mubr.f32.gmra.mrb[0].mxu0 %v306
    %v446 = vpop.f32.mrb[0].mxu0
    %v447 = vadd.f32 %v378, %v446
    %v448 = vpop.f32.mrb[0].mxu0
    %449 = vdwg.mxu0
    %450 = vmatprep.subr.mxu0 0.0
    %451 = vmatpush1.msra.mxu0 %v342
    %452 = vmatprep.subr.mxu0 0.0
    %453 = vmatpush1.msra.mxu0 %v343
    %454 = vmatprep.subr.mxu0 0.0
    %455 = vmatpush1.msra.mxu0 %v344
    %456 = vmatprep.subr.mxu0 0.0
    %457 = vmatpush1.msra.mxu0 %v345
    %458 = vmatprep.subr.mxu0 0.0
    %459 = vmatpush1.msra.mxu0 %v346
    %460 = vmatprep.subr.mxu0 0.0
    %461 = vmatpush1.msra.mxu0 %v347
    %462 = vmatprep.subr.mxu0 0.0
    %463 = vmatpush1.msra.mxu0 %v348
    %464 = vmatprep.subr.mxu0 0.0
    %465 = vmatpush1.msra.mxu0 %v349
    %466 = vmatprep.subr.mxu0 0.0
    %467 = vmatpush1.msra.mxu0 %v350
    %468 = vmatprep.subr.mxu0 0.0
    %469 = vmatpush1.msra.mxu0 %v351
    %470 = vmatprep.subr.mxu0 0.0
    %471 = vmatpush1.msra.mxu0 %v352
    %472 = vmatprep.subr.mxu0 0.0
    %473 = vmatpush1.msra.mxu0 %v353
    %474 = vmatprep.subr.mxu0 0.0
    %475 = vmatpush1.msra.mxu0 %v354
    %476 = vmatprep.subr.mxu0 0.0
    %477 = vmatpush1.msra.mxu0 %v355
    %478 = vmatprep.subr.mxu0 0.0
    %479 = vmatpush1.msra.mxu0 %v356
    %480 = vmatprep.subr.mxu0 0.0
    %481 = vmatpush1.msra.mxu0 %v357
    %482 = vmatprep.subr.mxu0 0.0
    %483 = vmatpush1.msra.mxu0 %v358
    %484 = vmatprep.subr.mxu0 0.0
    %485 = vmatpush1.msra.mxu0 %v359
    %486 = vmatprep.subr.mxu0 0.0
    %487 = vmatpush1.msra.mxu0 %v360
    %488 = vmatprep.subr.mxu0 0.0
    %489 = vmatpush1.msra.mxu0 %v361
    %490 = vmatprep.subr.mxu0 0.0
    %491 = vmatpush1.msra.mxu0 %v362
    %492 = vmatprep.subr.mxu0 0.0
    %493 = vmatpush1.msra.mxu0 %v363
    %494 = vmatprep.subr.mxu0 0.0
    %495 = vmatpush1.msra.mxu0 %v364
    %496 = vmatprep.subr.mxu0 0.0
    %497 = vmatpush1.msra.mxu0 %v365
    %498 = vmatprep.subr.mxu0 0.0
    %499 = vmatpush1.msra.mxu0 %v366
    %500 = vmatprep.subr.mxu0 0.0
    %501 = vmatpush1.msra.mxu0 %v367
    %502 = vmatprep.subr.mxu0 0.0
    %503 = vmatpush1.msra.mxu0 %v368
    %504 = vmatprep.subr.mxu0 0.0
    %505 = vmatpush1.msra.mxu0 %v369
    %506 = vmatprep.subr.mxu0 0.0
    %507 = vmatpush1.msra.mxu0 %v370
    %508 = vmatprep.subr.mxu0 0.0
    %509 = vmatpush1.msra.mxu0 %v371
    %510 = vmatprep.subr.mxu0 0.0
    %511 = vmatpush1.msra.mxu0 %v372
    %512 = vmatprep.subr.mxu0 0.0
    %513 = vmatpush1.msra.mxu0 %v373
    %514 = vmatprep.mubr.f32.mxu0 %v309
    %515 = vmatmul.mubr.f32.gmra.mrb[0].mxu0 %v308
    %v516 = vpop.f32.mrb[0].mxu0
    %v517 = vadd.f32 %v447, %v516
    %v518 = vpop.f32.mrb[0].mxu0
    %519 = vdwg.mxu0
    %v520 = vtanh.pop %v517
    %v521 = vld [vmem:[%s4] sm:$0xf]
    %vm522 = vcmask 31744
    %v524 = vsel %vm522, %v69, 0
    %vm526 = vcmask 1043456
    %v528 = vsel %vm526, %v521, 0
    %530 = vmatprep.subr.mxu0 0.0
    %531 = vmatpush1.msra.mxu0 %v528
    %532 = vmatprep.subr.mxu0 0.0
    %533 = vmatpush1.msra.mxu0 0.0
    %534 = vmatprep.subr.mxu0 0.0
    %535 = vmatpush1.msra.mxu0 0.0
    %536 = vmatprep.subr.mxu0 0.0
    %537 = vmatpush1.msra.mxu0 0.0
    %538 = vmatprep.subr.mxu0 0.0
    %539 = vmatpush1.msra.mxu0 0.0
    %540 = vmatprep.subr.mxu0 0.0
    %541 = vmatpush1.msra.mxu0 0.0
    %542 = vmatprep.subr.mxu0 0.0
    %543 = vmatpush1.msra.mxu0 0.0
    %544 = vmatprep.subr.mxu0 0.0
    %545 = vmatpush1.msra.mxu0 0.0
    %546 = vmatprep.subr.mxu0 0.0
    %547 = vmatpush1.msra.mxu0 0.0
    %548 = vmatprep.subr.mxu0 0.0
    %549 = vmatpush1.msra.mxu0 0.0
    %550 = vmatprep.subr.mxu0 0.0
    %551 = vmatpush1.msra.mxu0 0.0
    %552 = vmatprep.subr.mxu0 0.0
    %553 = vmatpush1.msra.mxu0 0.0
    %554 = vmatprep.subr.mxu0 0.0
    %555 = vmatpush1.msra.mxu0 0.0
    %556 = vmatprep.subr.mxu0 0.0
    %557 = vmatpush1.msra.mxu0 0.0
    %558 = vmatprep.subr.mxu0 0.0
    %559 = vmatpush1.msra.mxu0 0.0
    %560 = vmatprep.subr.mxu0 0.0
    %561 = vmatpush1.msra.mxu0 0.0
    %562 = vmatprep.subr.mxu0 0.0
    %563 = vmatpush1.msra.mxu0 0.0
    %564 = vmatprep.subr.mxu0 0.0
    %565 = vmatpush1.msra.mxu0 0.0
    %566 = vmatprep.subr.mxu0 0.0
    %567 = vmatpush1.msra.mxu0 0.0
    %568 = vmatprep.subr.mxu0 0.0
    %569 = vmatpush1.msra.mxu0 0.0
    %570 = vmatprep.subr.mxu0 0.0
    %571 = vmatpush1.msra.mxu0 0.0
    %572 = vmatprep.subr.mxu0 0.0
    %573 = vmatpush1.msra.mxu0 0.0
    %574 = vmatprep.subr.mxu0 0.0
    %575 = vmatpush1.msra.mxu0 0.0
    %576 = vmatprep.subr.mxu0 0.0
    %577 = vmatpush1.msra.mxu0 0.0
    %578 = vmatprep.subr.mxu0 0.0
    %579 = vmatpush1.msra.mxu0 0.0
    %580 = vmatprep.subr.mxu0 0.0
    %581 = vmatpush1.msra.mxu0 0.0
    %582 = vmatprep.subr.mxu0 0.0
    %583 = vmatpush1.msra.mxu0 0.0
    %584 = vmatprep.subr.mxu0 0.0
    %585 = vmatpush1.msra.mxu0 0.0
    %586 = vmatprep.subr.mxu0 0.0
    %587 = vmatpush1.msra.mxu0 0.0
    %588 = vmatprep.subr.mxu0 0.0
    %589 = vmatpush1.msra.mxu0 0.0
    %590 = vmatprep.subr.mxu0 0.0
    %591 = vmatpush1.msra.mxu0 0.0
    %592 = vmatprep.subr.mxu0 0.0
    %593 = vmatpush1.msra.mxu0 0.0
    %594 = vmatprep.mubr.f32.mxu0 0.0
    %595 = vmatmul.mubr.f32.gmra.mrb[0].mxu0 %v524
    %v596 = vpop.f32.mrb[0].mxu0
    %v597 = vadd.f32 0.0, %v596
    %v598 = vpop.f32.mrb[0].mxu0
    %599 = vdwg.mxu0
    %600 = vmatprep.subr.mxu0 0.0
    %601 = vmatpush1.msra.mxu0 %v75
    %602 = vmatprep.subr.mxu0 0.0
    %603 = vmatpush1.msra.mxu0 %v76
    %604 = vmatprep.subr.mxu0 0.0
    %605 = vmatpush1.msra.mxu0 %v77
    %606 = vmatprep.subr.mxu0 0.0
    %607 = vmatpush1.msra.mxu0 %v78
    %608 = vmatprep.subr.mxu0 0.0
    %609 = vmatpush1.msra.mxu0 %v79
    %610 = vmatprep.subr.mxu0 0.0
    %611 = vmatpush1.msra.mxu0 %v80
    %612 = vmatprep.subr.mxu0 0.0
    %613 = vmatpush1.msra.mxu0 %v81
    %614 = vmatprep.subr.mxu0 0.0
    %615 = vmatpush1.msra.mxu0 %v82
    %616 = vmatprep.subr.mxu0 0.0
    %617 = vmatpush1.msra.mxu0 %v83
    %618 = vmatprep.subr.mxu0 0.0
    %619 = vmatpush1.msra.mxu0 %v84
    %620 = vmatprep.subr.mxu0 0.0
    %621 = vmatpush1.msra.mxu0 %v85
    %622 = vmatprep.subr.mxu0 0.0
    %623 = vmatpush1.msra.mxu0 %v86
    %624 = vmatprep.subr.mxu0 0.0
    %625 = vmatpush1.msra.mxu0 %v87
    %626 = vmatprep.subr.mxu0 0.0
    %627 = vmatpush1.msra.mxu0 %v88
    %628 = vmatprep.subr.mxu0 0.0
    %629 = vmatpush1.msra.mxu0 %v89
    %630 = vmatprep.subr.mxu0 0.0
    %631 = vmatpush1.msra.mxu0 %v90
    %632 = vmatprep.subr.mxu0 0.0
    %633 = vmatpush1.msra.mxu0 0.0
    %634 = vmatprep.subr.mxu0 0.0
    %635 = vmatpush1.msra.mxu0 0.0
    %636 = vmatprep.subr.mxu0 0.0
    %637 = vmatpush1.msra.mxu0 0.0
    %638 = vmatprep.subr.mxu0 0.0
    %639 = vmatpush1.msra.mxu0 0.0
    %640 = vmatprep.subr.mxu0 0.0
    %641 = vmatpush1.msra.mxu0 0.0
    %642 = vmatprep.subr.mxu0 0.0
    %643 = vmatpush1.msra.mxu0 0.0
    %644 = vmatprep.subr.mxu0 0.0
    %645 = vmatpush1.msra.mxu0 0.0
    %646 = vmatprep.subr.mxu0 0.0
    %647 = vmatpush1.msra.mxu0 0.0
    %648 = vmatprep.subr.mxu0 0.0
    %649 = vmatpush1.msra.mxu0 0.0
    %650 = vmatprep.subr.mxu0 0.0
    %651 = vmatpush1.msra.mxu0 0.0
    %652 = vmatprep.subr.mxu0 0.0
    %653 = vmatpush1.msra.mxu0 0.0
    %654 = vmatprep.subr.mxu0 0.0
    %655 = vmatpush1.msra.mxu0 0.0
    %656 = vmatprep.subr.mxu0 0.0
    %657 = vmatpush1.msra.mxu0 0.0
    %658 = vmatprep.subr.mxu0 0.0
    %659 = vmatpush1.msra.mxu0 0.0
    %660 = vmatprep.subr.mxu0 0.0
    %661 = vmatpush1.msra.mxu0 0.0
    %662 = vmatprep.subr.mxu0 0.0
    %663 = vmatpush1.msra.mxu0 0.0
    %664 = vmatprep.mubr.f32.mxu0 0.0
    %665 = vmatmul.mubr.f32.gmra.mrb[0].mxu0 %v520
    %v666 = vpop.f32.mrb[0].mxu0
    %v667 = vadd.f32 %v597, %v666
    %v668 = vpop.f32.mrb[0].mxu0
    %669 = vdwg.mxu0
    %v671 = vlaneseq
    %v672 = vshrl.u32 %v671, 7
    %v673 = vsub.s32 0, %v672
    %v674 = vrot.slane %v72, %v673
    %v676 = vadd.f32 %v667, %v674
    %v677 = vtanh.pop %v676
    %v679 = vlaneseq
    %v680 = vshrl.u32 %v679, 7
    %v681 = vsub.s32 0, %v680
    %v682 = vrot.slane %v73, %v681
    %684 = vmatprep.subr.mxu0 0.0
    %685 = vmatpush1.msra.mxu0 %v91
    %686 = vmatprep.subr.mxu0 0.0
    %687 = vmatpush1.msra.mxu0 %v92
    %688 = vmatprep.subr.mxu0 0.0
    %689 = vmatpush1.msra.mxu0 %v93
    %690 = vmatprep.subr.mxu0 0.0
    %691 = vmatpush1.msra.mxu0 %v94
    %692 = vmatprep.subr.mxu0 0.0
    %693 = vmatpush1.msra.mxu0 %v95
    %694 = vmatprep.subr.mxu0 0.0
    %695 = vmatpush1.msra.mxu0 %v96
    %696 = vmatprep.subr.mxu0 0.0
    %697 = vmatpush1.msra.mxu0 %v97
    %698 = vmatprep.subr.mxu0 0.0
    %699 = vmatpush1.msra.mxu0 %v98
    %700 = vmatprep.subr.mxu0 0.0
    %701 = vmatpush1.msra.mxu0 %v99
    %702 = vmatprep.subr.mxu0 0.0
    %703 = vmatpush1.msra.mxu0 %v100
    %704 = vmatprep.subr.mxu0 0.0
    %705 = vmatpush1.msra.mxu0 %v101
    %706 = vmatprep.subr.mxu0 0.0
    %707 = vmatpush1.msra.mxu0 %v102
    %708 = vmatprep.subr.mxu0 0.0
    %709 = vmatpush1.msra.mxu0 %v103
    %710 = vmatprep.subr.mxu0 0.0
    %711 = vmatpush1.msra.mxu0 %v104
    %712 = vmatprep.subr.mxu0 0.0
    %713 = vmatpush1.msra.mxu0 %v105
    %714 = vmatprep.subr.mxu0 0.0
    %715 = vmatpush1.msra.mxu0 %v106
    %716 = vmatprep.subr.mxu0 0.0
    %717 = vmatpush1.msra.mxu0 0.0
    %718 = vmatprep.subr.mxu0 0.0
    %719 = vmatpush1.msra.mxu0 0.0
    %720 = vmatprep.subr.mxu0 0.0
    %721 = vmatpush1.msra.mxu0 0.0
    %722 = vmatprep.subr.mxu0 0.0
    %723 = vmatpush1.msra.mxu0 0.0
    %724 = vmatprep.subr.mxu0 0.0
    %725 = vmatpush1.msra.mxu0 0.0
    %726 = vmatprep.subr.mxu0 0.0
    %727 = vmatpush1.msra.mxu0 0.0
    %728 = vmatprep.subr.mxu0 0.0
    %729 = vmatpush1.msra.mxu0 0.0
    %730 = vmatprep.subr.mxu0 0.0
    %731 = vmatpush1.msra.mxu0 0.0
    %732 = vmatprep.subr.mxu0 0.0
    %733 = vmatpush1.msra.mxu0 0.0
    %734 = vmatprep.subr.mxu0 0.0
    %735 = vmatpush1.msra.mxu0 0.0
    %736 = vmatprep.subr.mxu0 0.0
    %737 = vmatpush1.msra.mxu0 0.0
    %738 = vmatprep.subr.mxu0 0.0
    %739 = vmatpush1.msra.mxu0 0.0
    %740 = vmatprep.subr.mxu0 0.0
    %741 = vmatpush1.msra.mxu0 0.0
    %742 = vmatprep.subr.mxu0 0.0
    %743 = vmatpush1.msra.mxu0 0.0
    %744 = vmatprep.subr.mxu0 0.0
    %745 = vmatpush1.msra.mxu0 0.0
    %746 = vmatprep.subr.mxu0 0.0
    %747 = vmatpush1.msra.mxu0 0.0
    %748 = vmatprep.mubr.f32.mxu0 0.0
    %749 = vmatmul.mubr.f32.gmra.mrb[0].mxu0 %v677
    %v750 = vpop.f32.mrb[0].mxu0
    %v751 = vadd.f32 %v682, %v750
    %v752 = vpop.f32.mrb[0].mxu0
    %753 = vdwg.mxu0
    %v754 = vtanh.pop %v751
    %v756 = vlaneseq
    %v757 = vshrl.u32 %v756, 7
    %v758 = vsub.s32 0, %v757
    %v759 = vrot.slane %v74, %v758
    %761 = vmatprep.subr.mxu0 0.0
    %762 = vmatpush1.msra.mxu0 %v107
    %763 = vmatprep.subr.mxu0 0.0
    %764 = vmatpush1.msra.mxu0 %v108
    %765 = vmatprep.subr.mxu0 0.0
    %766 = vmatpush1.msra.mxu0 %v109
    %767 = vmatprep.subr.mxu0 0.0
    %768 = vmatpush1.msra.mxu0 %v110
    %769 = vmatprep.subr.mxu0 0.0
    %770 = vmatpush1.msra.mxu0 %v111
    %771 = vmatprep.subr.mxu0 0.0
    %772 = vmatpush1.msra.mxu0 %v112
    %773 = vmatprep.subr.mxu0 0.0
    %774 = vmatpush1.msra.mxu0 %v113
    %775 = vmatprep.subr.mxu0 0.0
    %776 = vmatpush1.msra.mxu0 %v114
    %777 = vmatprep.subr.mxu0 0.0
    %778 = vmatpush1.msra.mxu0 %v115
    %779 = vmatprep.subr.mxu0 0.0
    %780 = vmatpush1.msra.mxu0 %v116
    %781 = vmatprep.subr.mxu0 0.0
    %782 = vmatpush1.msra.mxu0 %v117
    %783 = vmatprep.subr.mxu0 0.0
    %784 = vmatpush1.msra.mxu0 %v118
    %785 = vmatprep.subr.mxu0 0.0
    %786 = vmatpush1.msra.mxu0 %v119
    %787 = vmatprep.subr.mxu0 0.0
    %788 = vmatpush1.msra.mxu0 %v120
    %789 = vmatprep.subr.mxu0 0.0
    %790 = vmatpush1.msra.mxu0 %v121
    %791 = vmatprep.subr.mxu0 0.0
    %792 = vmatpush1.msra.mxu0 %v122
    %793 = vmatprep.subr.mxu0 0.0
    %794 = vmatpush1.msra.mxu0 0.0
    %795 = vmatprep.subr.mxu0 0.0
    %796 = vmatpush1.msra.mxu0 0.0
    %797 = vmatprep.subr.mxu0 0.0
    %798 = vmatpush1.msra.mxu0 0.0
    %799 = vmatprep.subr.mxu0 0.0
    %800 = vmatpush1.msra.mxu0 0.0
    %801 = vmatprep.subr.mxu0 0.0
    %802 = vmatpush1.msra.mxu0 0.0
    %803 = vmatprep.subr.mxu0 0.0
    %804 = vmatpush1.msra.mxu0 0.0
    %805 = vmatprep.subr.mxu0 0.0
    %806 = vmatpush1.msra.mxu0 0.0
    %807 = vmatprep.subr.mxu0 0.0
    %808 = vmatpush1.msra.mxu0 0.0
    %809 = vmatprep.subr.mxu0 0.0
    %810 = vmatpush1.msra.mxu0 0.0
    %811 = vmatprep.subr.mxu0 0.0
    %812 = vmatpush1.msra.mxu0 0.0
    %813 = vmatprep.subr.mxu0 0.0
    %814 = vmatpush1.msra.mxu0 0.0
    %815 = vmatprep.subr.mxu0 0.0
    %816 = vmatpush1.msra.mxu0 0.0
    %817 = vmatprep.subr.mxu0 0.0
    %818 = vmatpush1.msra.mxu0 0.0
    %819 = vmatprep.subr.mxu0 0.0
    %820 = vmatpush1.msra.mxu0 0.0
    %821 = vmatprep.subr.mxu0 0.0
    %822 = vmatpush1.msra.mxu0 0.0
    %823 = vmatprep.subr.mxu0 0.0
    %824 = vmatpush1.msra.mxu0 0.0
    %825 = vmatprep.mubr.f32.mxu0 0.0
    %826 = vmatmul.mubr.f32.gmra.mrb[0].mxu0 %v754
    %v827 = vpop.f32.mrb[0].mxu0
    %v828 = vadd.f32 %v759, %v827
    %v829 = vpop.f32.mrb[0].mxu0
    %830 = vdwg.mxu0
    %831 = vst [vmem:[#allocation8] sm:$0xff] %v828
    // Predicated region
    $region42: #{tpu_custom_call.1} parent=1 // pred_check
      _
    $region43: #{tpu_custom_call.1} parent=1 // pred_check_branch
      %833 = sbr.rel (0) target = $region45
    $region44: #{tpu_custom_call.1} parent=1 // pred_region
      %s835 = ssub.s32 128, 128
      %836 = vsyncadd [#allocation4], %s835
      %s838 = sshll.u32 [#allocation8], 4
      %s839 = int_to_ptr.vmem [resolvable:$true] %s838
      %841 = dma.vmem_to_hbm [thread:$0]  %s839, 128, %s7, [#allocation4]
    $region45: #{tpu_custom_call.1} parent=1 // pred_fallthru
      _
    // Predicated region
    $region46: #{tpu_custom_call.1} parent=1 // pred_check
      _
    $region47: #{tpu_custom_call.1} parent=1 // pred_check_branch
      %843 = sbr.rel (0) target = $region49
    $region48: #{tpu_custom_call.1} parent=1 // pred_region
      %844 = dma.done [#allocation4], 128
    $region49: #{tpu_custom_call.1} parent=1 // pred_fallthru
      _
    %845 = vsyncpa [#allocation3], 1
    %846 = vsyncpa [#allocation6], 1
    %847 = vsyncpa [#allocation4], 1

</llo_original>
